<compile_context>
chip_gen: v7x
topology: tpu7x:2x2x1
jax: 0.10.0
libtpu: 0.0.40
codegen_flags: <defaults>
</compile_context>

<pallas_src>
import functools
import math
import random

import jax
import jax.numpy as jnp
from jax.experimental import pallas as pl
from jax.experimental.pallas import tpu as pltpu


# ---------------------------------------------------------------------------
# Filterbank construction (trace-time setup glue — plain JAX / math).
# Faithful to the torch code, including the sequential in-place warping
# (the > thr mask is evaluated AFTER the <= thr entries were scaled by alpha).
# ---------------------------------------------------------------------------
def create_vtlp_fb_matrix(n_freqs, f_min, f_max, n_mels, sample_rate, alpha,
                          f_hi=4800.0, training=True):
    S = float(sample_rate)
    all_freqs = jnp.linspace(0.0, float(sample_rate // 2), n_freqs, dtype=jnp.float32)
    m_min = 2595.0 * math.log10(1.0 + f_min / 700.0)
    m_max = 2595.0 * math.log10(1.0 + f_max / 700.0)
    m_pts = jnp.linspace(m_min, m_max, n_mels + 2, dtype=jnp.float32)
    f_pts = 700.0 * (jnp.power(10.0, m_pts / 2595.0) - 1.0)
    if training:
        # NOTE: inherited from the reference: if f_hi*min(alpha,1)/alpha == S/2 the
        # warp divides by zero (inf/NaN), exactly as in the PyTorch code.
        thr = f_hi * min(alpha, 1.0) / alpha
        # step 1: scale everything at / below the threshold
        f_scaled = jnp.where(f_pts <= thr, f_pts * alpha, f_pts)
        # step 2: warp whatever is now above the threshold (matches torch in-place order)
        f_warp = (S / 2.0
                  - (S / 2.0 - f_hi * min(alpha, 1.0)) / (S / 2.0 - thr)
                  * (S / 2.0 - f_scaled))
        f_pts = jnp.where(f_scaled > thr, f_warp, f_scaled)
    f_diff = f_pts[1:] - f_pts[:-1]                       # (n_mels + 1,)
    slopes = f_pts[None, :] - all_freqs[:, None]          # (F, n_mels + 2)
    down_slopes = -1.0 * slopes[:, :-2] / f_diff[:-1]     # (F, n_mels)
    up_slopes = slopes[:, 2:] / f_diff[1:]                # (F, n_mels)
    fb = jnp.maximum(0.0, jnp.minimum(down_slopes, up_slopes))
    return fb.astype(jnp.float32)                         # (F, M)


# ---------------------------------------------------------------------------
# Pallas kernel: out = fbT @ spec  (per grid step; all refs are 2-D views).
#   spec_ref: (F, tile)   input dtype  -> cast to compute dtype in VMEM (VPU)
#   fbt_ref : (M, F)      compute dtype, VMEM-resident across the grid
#   out_ref : (M, tile)   output dtype
# ---------------------------------------------------------------------------
def _mel_kernel(spec_ref, fbt_ref, out_ref, *, compute_dtype):
    spec = spec_ref[...].astype(compute_dtype)
    out_ref[...] = jnp.dot(fbt_ref[...], spec,
                           preferred_element_type=jnp.float32).astype(out_ref.dtype)


def _round_up(x, m):
    return (x + m - 1) // m * m


def _choose_lane_tile(n_cols, rows_in, rows_out, block_t, in_itemsize, out_itemsize,
                      fb_bytes, vmem_budget=12 * 1024 * 1024):
    """Lane-dense (multiple-of-128) tile <= n_cols, sized for ~1-4 MiB per step but
    keeping double-buffered blocks + the resident filterbank inside a VMEM budget
    that is safe under every generation's scoped-VMEM default."""
    if n_cols < 128:
        return n_cols                                      # full extent (legal block dim)
    tile = min(_round_up(int(block_t), 128), max(128, (n_cols // 128) * 128))
    per_col = 2 * (rows_in * in_itemsize + rows_out * out_itemsize)   # double-buffered
    fit_cols = max(128, ((vmem_budget - fb_bytes) // max(per_col, 1)) // 128 * 128)
    return max(128, min(tile, fit_cols))


def vtlp_mel_scale(specgram, *, n_mels=128, sample_rate=16000,
                   f_min=0.0, f_max=None, alpha=1.0, training=True,
                   compute_dtype=jnp.float32, out_dtype=None, block_t=2048):
    """JAX/Pallas equivalent of VtlpMelScale.forward (alpha supplied explicitly)."""
    f_max = f_max if f_max is not None else float(sample_rate // 2)
    assert f_min <= f_max, 'Require f_min: %f < f_max: %f' % (f_min, f_max)

    shape = specgram.shape
    F, T = int(shape[-2]), int(shape[-1])
    B = int(math.prod(shape[:-2])) if len(shape) > 2 else 1
    M = int(n_mels)
    if out_dtype is None:
        out_dtype = (specgram.dtype if jnp.issubdtype(specgram.dtype, jnp.floating)
                     else jnp.float32)

    spec = specgram.reshape(B, F, T)

    fb = create_vtlp_fb_matrix(F, f_min, f_max, M, sample_rate, alpha,
                               training=training)          # (F, M) f32
    fbt = fb.T.astype(compute_dtype)                        # (M, F), tiny, VMEM-resident

    kernel = functools.partial(_mel_kernel, compute_dtype=compute_dtype)
    in_itemsize = jnp.dtype(spec.dtype).itemsize
    out_itemsize = jnp.dtype(out_dtype).itemsize
    fb_bytes = M * F * jnp.dtype(compute_dtype).itemsize

    cost = pl.CostEstimate(
        flops=2 * B * M * F * T,
        bytes_accessed=B * F * T * in_itemsize + B * M * T * out_itemsize + fb_bytes,
        transcendentals=0,
    )

    if T >= 128:
        # ------------------------------------------------------------------
        # Large-T path: grid over (time tiles, batch); batch dim squeezed out
        # of the block so each step is one lane-dense (M,F)@(F,tT) matmul.
        # Ragged time tail handled by cdiv grid + Mosaic boundary masking.
        # ------------------------------------------------------------------
        tT = _choose_lane_tile(T, F, M, block_t, in_itemsize, out_itemsize, fb_bytes)
        nt = pl.cdiv(T, tT)
        if nt >= B:
            grid = (nt, B)                                  # most-steps axis first
            io_map = lambda ti, bi: (bi, 0, ti)
            fb_map = lambda ti, bi: (0, 0)
        else:
            grid = (B, nt)
            io_map = lambda bi, ti: (bi, 0, ti)
            fb_map = lambda bi, ti: (0, 0)

        out = pl.pallas_call(
            kernel,
            out_shape=jax.ShapeDtypeStruct((B, M, T), out_dtype),
            grid_spec=pl.GridSpec(
                grid=grid,
                in_specs=[
                    pl.BlockSpec((None, F, tT), io_map),    # kernel sees (F, tT)
                    pl.BlockSpec((M, F), fb_map),           # constant -> resident
                ],
                out_specs=pl.BlockSpec((None, M, tT), io_map),
            ),
            compiler_params=pltpu.CompilerParams(
                dimension_semantics=("parallel", "parallel")),
            cost_estimate=cost,
        )(spec, fbt)
        return out.reshape(shape[:-2] + (M, T))

    # ----------------------------------------------------------------------
    # Small-T path (T < 128): flatten to a single lane-dense matmul
    #   (M, F) @ (F, B*T) -> (M, B*T)
    # instead of B tiny matmuls with masked 16-wide partial stores.
    # The transpose/reshape touches only a tiny array.
    # ----------------------------------------------------------------------
    N = B * T
    spec2d = jnp.transpose(spec, (1, 0, 2)).reshape(F, N)
    tN = _choose_lane_tile(N, F, M, block_t, in_itemsize, out_itemsize, fb_bytes)
    nn = pl.cdiv(N, tN)

    out2d = pl.pallas_call(
        kernel,
        out_shape=jax.ShapeDtypeStruct((M, N), out_dtype),
        grid_spec=pl.GridSpec(
            grid=(nn,),
            in_specs=[
                pl.BlockSpec((F, tN), lambda ni: (0, ni)),
                pl.BlockSpec((M, F), lambda ni: (0, 0)),
            ],
            out_specs=pl.BlockSpec((M, tN), lambda ni: (0, ni)),
        ),
        compiler_params=pltpu.CompilerParams(dimension_semantics=("parallel",)),
        cost_estimate=cost,
    )(spec2d, fbt)

    out = jnp.transpose(out2d.reshape(M, B, T), (1, 0, 2))
    return out.reshape(shape[:-2] + (M, T))


if __name__ == "__main__":
    # Deterministic VTLP warp factor (PyTorch: random.random() * 0.2 + 0.9).
    random.seed(0)
    alpha = random.random() * 0.2 + 0.9

    key = jax.random.PRNGKey(0)

    # Case 1: small shapes matching the module defaults: (2, 4, 65, 16), n_mels=32.
    # Exercises the flattened small-T path (B*T = 128 -> single lane-dense tile).
    x = jax.random.uniform(key, (2, 4, 65, 16), dtype=jnp.float32)

    mel = vtlp_mel_scale(x, n_mels=32, sample_rate=16000,
                         f_min=0.0, f_max=None, alpha=alpha, training=True)
    mel = jax.block_until_ready(mel)
    assert mel.shape == (2, 4, 32, 16), mel.shape
    assert mel.dtype == jnp.float32, mel.dtype

    fb = create_vtlp_fb_matrix(65, 0.0, float(16000 // 2), 32, 16000, alpha,
                               training=True)
    ref = jnp.einsum('bcft,fm->bcmt', x, fb)
    assert jnp.allclose(mel, ref, atol=1e-3, rtol=1e-3)

    # Optional bf16-compute path (documented ~1e-2 relative error).
    mel_bf16 = vtlp_mel_scale(x, n_mels=32, sample_rate=16000,
                              f_min=0.0, f_max=None, alpha=alpha, training=True,
                              compute_dtype=jnp.bfloat16)
    mel_bf16 = jax.block_until_ready(mel_bf16)
    assert jnp.allclose(mel_bf16, ref, atol=5e-2, rtol=5e-2)

    # Case 2: longer time axis -> tiled large-T path with a ragged (masked) tail.
    x2 = jax.random.uniform(jax.random.PRNGKey(1), (2, 65, 300), dtype=jnp.float32)
    ref2 = jnp.einsum('bft,fm->bmt', x2, fb)

    # 2a: small block_t -> grid (cdiv(300,128)=3, 2), masked last time tile.
    mel2 = vtlp_mel_scale(x2, n_mels=32, sample_rate=16000,
                          f_min=0.0, f_max=None, alpha=alpha, training=True,
                          block_t=128)
    mel2 = jax.block_until_ready(mel2)
    assert mel2.shape == (2, 32, 300), mel2.shape
    assert jnp.allclose(mel2, ref2, atol=1e-3, rtol=1e-3)

    # 2b: default block_t -> tT clamps to 256 (largest lane multiple <= T), grid (2, 2).
    mel2b = vtlp_mel_scale(x2, n_mels=32, sample_rate=16000,
                           f_min=0.0, f_max=None, alpha=alpha, training=True)
    mel2b = jax.block_until_ready(mel2b)
    assert jnp.allclose(mel2b, ref2, atol=1e-3, rtol=1e-3)

    print("KERNEL_OK")
</pallas_src>

<mosaic_0001>
module attributes {stable_mosaic.version = 11 : i64} {
  func.func @_mel_kernel(%arg0: i32, %arg1: memref<65x128xf32, #tpu.memory_space<vmem>>, %arg2: memref<32x65xf32, #tpu.memory_space<vmem>>, %arg3: memref<32x128xf32, #tpu.memory_space<vmem>>) attributes {dimension_semantics = [#tpu.dimension_semantics<parallel>], iteration_bounds = array<i64: 1>, scalar_prefetch = 0 : i64, scratch_operands = 0 : i64, tpu.core_type = #tpu.core_type<tc>, window_params = [{transform_indices = @transform_0, window_bounds = array<i64: 65, 128>}, {pipeline_mode = #tpu.pipeline_mode<synchronous>, transform_indices = @transform_1, window_bounds = array<i64: 32, 65>}, {transform_indices = @transform_2, window_bounds = array<i64: 32, 128>}]} {
    %c0 = arith.constant 0 : index
    %c0_0 = arith.constant 0 : index
    %0 = vector.load %arg1[%c0, %c0_0] : memref<65x128xf32, #tpu.memory_space<vmem>>, vector<65x128xf32>
    %c0_1 = arith.constant 0 : index
    %c0_2 = arith.constant 0 : index
    %1 = vector.load %arg2[%c0_1, %c0_2] : memref<32x65xf32, #tpu.memory_space<vmem>>, vector<32x65xf32>
    %cst = arith.constant dense<0.000000e+00> : vector<32x128xf32>
    %2 = tpu.matmul %1, %0, %cst {dimension_numbers = #tpu.dot_dimension_numbers<[1], [0], [0], [1], [0, 0, 1, 1], [], []>} : vector<32x65xf32>, vector<65x128xf32>, vector<32x128xf32> -> vector<32x128xf32>
    %c0_3 = arith.constant 0 : index
    %c0_4 = arith.constant 0 : index
    %3 = vector.load %arg3[%c0_3, %c0_4] : memref<32x128xf32, #tpu.memory_space<vmem>>, vector<32x128xf32>
    tpu.vector_store %arg3[%c0_3, %c0_4], %2 {strides = array<i32>} : memref<32x128xf32, #tpu.memory_space<vmem>>, vector<32x128xf32>,
    return
  }
  func.func @transform_0(%arg0: i32) -> (i32, i32) {
    %c0_i32 = arith.constant 0 : i32
    %c0_i32_0 = arith.constant 0 : i32
    return %c0_i32, %arg0 : i32, i32
  }
  func.func @transform_1(%arg0: i32) -> (i32, i32) {
    %c0_i32 = arith.constant 0 : i32
    %c0_i32_0 = arith.constant 0 : i32
    %c0_i32_1 = arith.constant 0 : i32
    return %c0_i32, %c0_i32_0 : i32, i32
  }
  func.func @transform_2(%arg0: i32) -> (i32, i32) {
    %c0_i32 = arith.constant 0 : i32
    %c0_i32_0 = arith.constant 0 : i32
    return %c0_i32, %arg0 : i32, i32
  }
}

</mosaic_0001>

<llo_original>
// kernel: tpu_custom_call.1
$region0: #{tpu_custom_call.1}
  #allocation0 [shape = 'u32[]', space=smem, size = 0x4, offset = 0x4, fixed_abs, tag = 'smem constant byte address 0x4 - core index']
  #allocation1 [shape = 'u32[144,128]{1,0:T(1,128)}', space=vmem, size = 0x12000, scoped, tag = 'internal scratch']
  %s0 = inlined_call_operand.hbm [shape: f32[65,128], index: 0, kind: input, shape index: {}]
  %s1 = inlined_call_operand.hbm [shape: f32[32,65], index: 1, kind: input, shape index: {}]
  %s2 = inlined_call_operand.hbm [shape: f32[32,128], index: 2, kind: output, shape index: {}]
  %s3 = sld [smem:[#allocation0]]
  $region26: #{tpu_custom_call.1} parent=0
    _
  %s5 = ssub.s32 1, %s3
  %s6 = scalar_select 0, %s5, %s3
  $region1: #{tpu_custom_call.1} parent=0
    #allocation2 [shape = 'u8[36864]{0}', space=vmem, size = 0x9000, scoped, tag = 'input window, operand 0, single buffered']
    #allocation3 [shape = 's32[1]{0}', space=sflag, size = 0x4, scoped, tag = 'scoped memory for tpu_custom_call.1']
    #allocation4 [shape = 's32[1]{0}', space=sflag, size = 0x4, scoped, tag = 'scoped memory for tpu_custom_call.1']
    #allocation5 [shape = 'u8[16384]{0}', space=vmem, size = 0x4000, scoped, tag = 'input window, operand 1, single buffered']
    #allocation6 [shape = 's32[1]{0}', space=sflag, size = 0x4, scoped, tag = 'scoped memory for tpu_custom_call.1']
    #allocation7 [shape = 'u8[16384]{0}', space=vmem, size = 0x4000, scoped, tag = 'output window, operand 0, single buffered']
    %7 = vsyncpa [#allocation3], 0
    %8 = vsyncpa [#allocation6], 0
    %9 = vsyncpa [#allocation4], 0
    // Predicated region
    $region2: #{tpu_custom_call.1} parent=1 // pred_check
      _
    $region3: #{tpu_custom_call.1} parent=1 // pred_check_branch
      %11 = sbr.rel (0) target = $region5
    $region4: #{tpu_custom_call.1} parent=1 // pred_region
      %s13 = ssub.s32 1152, 1152
      %14 = vsyncadd [#allocation3], %s13
      %s15 = sshll.u32 [#allocation2], 4
      %s16 = int_to_ptr.vmem [resolvable:$true] %s15
      %21 = dma.hbm_to_vmem [thread:$0]  %s0, 1152, %s16, [#allocation3], 128, 128, 8
    $region5: #{tpu_custom_call.1} parent=1 // pred_fallthru
      _
    // Predicated region
    $region6: #{tpu_custom_call.1} parent=1 // pred_check
      _
    $region7: #{tpu_custom_call.1} parent=1 // pred_check_branch
      %23 = sbr.rel (0) target = $region9
    $region8: #{tpu_custom_call.1} parent=1 // pred_region
      %s25 = ssub.s32 512, 512
      %26 = vsyncadd [#allocation6], %s25
      %s27 = sshll.u32 [#allocation5], 4
      %s28 = int_to_ptr.vmem [resolvable:$true] %s27
      %33 = dma.hbm_to_vmem [thread:$0]  %s1, 512, %s28, [#allocation6], 128, 128, 8
    $region9: #{tpu_custom_call.1} parent=1 // pred_fallthru
      _
    // Predicated region
    $region10: #{tpu_custom_call.1} parent=1 // pred_check
      _
    $region11: #{tpu_custom_call.1} parent=1 // pred_check_branch
      %35 = sbr.rel (0) target = $region13
    $region12: #{tpu_custom_call.1} parent=1 // pred_region
      %36 = dma.done [#allocation3], 1152
    $region13: #{tpu_custom_call.1} parent=1 // pred_fallthru
      _
    // Predicated region
    $region14: #{tpu_custom_call.1} parent=1 // pred_check
      _
    $region15: #{tpu_custom_call.1} parent=1 // pred_check_branch
      %38 = sbr.rel (0) target = $region17
    $region16: #{tpu_custom_call.1} parent=1 // pred_region
      %39 = dma.done [#allocation6], 512
    $region17: #{tpu_custom_call.1} parent=1 // pred_fallthru
      _
    %v40 = vld [vmem:[#allocation2] sm:$0xff]
    %v41 = vld [vmem:[#allocation2 + $0x8] sm:$0xff]
    %v42 = vld [vmem:[#allocation2 + $0x10] sm:$0xff]
    %v43 = vld [vmem:[#allocation2 + $0x18] sm:$0xff]
    %v44 = vld [vmem:[#allocation2 + $0x20] sm:$0xff]
    %v45 = vld [vmem:[#allocation2 + $0x28] sm:$0xff]
    %v46 = vld [vmem:[#allocation2 + $0x30] sm:$0xff]
    %v47 = vld [vmem:[#allocation2 + $0x38] sm:$0xff]
    %v48 = vld [vmem:[#allocation2 + $0x40] sm:$0x1]
    %v49 = vld [vmem:[#allocation5] sm:$0xff]
    %v50 = vld [vmem:[#allocation5 + $0x8] sm:$0xff]
    %v51 = vld [vmem:[#allocation5 + $0x10] sm:$0xff]
    %v52 = vld [vmem:[#allocation5 + $0x18] sm:$0xff]
    %vm53 = vcmask 531456
    %v55 = vsel %vm53, %v49, 0
    %v58 = vsel %vm53, %v50, 0
    %v61 = vsel %vm53, %v51, 0
    %v64 = vsel %vm53, %v52, 0
    %vm66 = vcmask 1040384
    %v68 = vsel %vm66, %v48, 0
    %70 = vmatprep.subr.mxu0 0.0
    %71 = vmatpush1.msra.mxu0 %v40
    %72 = vmatprep.subr.mxu0 0.0
    %73 = vmatpush1.msra.mxu0 %v41
    %74 = vmatprep.subr.mxu0 0.0
    %75 = vmatpush1.msra.mxu0 %v42
    %76 = vmatprep.subr.mxu0 0.0
    %77 = vmatpush1.msra.mxu0 %v43
    %78 = vmatprep.subr.mxu0 0.0
    %79 = vmatpush1.msra.mxu0 %v44
    %80 = vmatprep.subr.mxu0 0.0
    %81 = vmatpush1.msra.mxu0 %v45
    %82 = vmatprep.subr.mxu0 0.0
    %83 = vmatpush1.msra.mxu0 %v46
    %84 = vmatprep.subr.mxu0 0.0
    %85 = vmatpush1.msra.mxu0 %v47
    %86 = vmatprep.subr.mxu0 0.0
    %87 = vmatpush1.msra.mxu0 %v68
    %88 = vmatprep.subr.mxu0 0.0
    %89 = vmatpush1.msra.mxu0 0.0
    %90 = vmatprep.subr.mxu0 0.0
    %91 = vmatpush1.msra.mxu0 0.0
    %92 = vmatprep.subr.mxu0 0.0
    %93 = vmatpush1.msra.mxu0 0.0
    %94 = vmatprep.subr.mxu0 0.0
    %95 = vmatpush1.msra.mxu0 0.0
    %96 = vmatprep.subr.mxu0 0.0
    %97 = vmatpush1.msra.mxu0 0.0
    %98 = vmatprep.subr.mxu0 0.0
    %99 = vmatpush1.msra.mxu0 0.0
    %100 = vmatprep.subr.mxu0 0.0
    %101 = vmatpush1.msra.mxu0 0.0
    %102 = vmatprep.subr.mxu0 0.0
    %103 = vmatpush1.msra.mxu0 0.0
    %104 = vmatprep.subr.mxu0 0.0
    %105 = vmatpush1.msra.mxu0 0.0
    %106 = vmatprep.subr.mxu0 0.0
    %107 = vmatpush1.msra.mxu0 0.0
    %108 = vmatprep.subr.mxu0 0.0
    %109 = vmatpush1.msra.mxu0 0.0
    %110 = vmatprep.subr.mxu0 0.0
    %111 = vmatpush1.msra.mxu0 0.0
    %112 = vmatprep.subr.mxu0 0.0
    %113 = vmatpush1.msra.mxu0 0.0
    %114 = vmatprep.subr.mxu0 0.0
    %115 = vmatpush1.msra.mxu0 0.0
    %116 = vmatprep.subr.mxu0 0.0
    %117 = vmatpush1.msra.mxu0 0.0
    %118 = vmatprep.subr.mxu0 0.0
    %119 = vmatpush1.msra.mxu0 0.0
    %120 = vmatprep.subr.mxu0 0.0
    %121 = vmatpush1.msra.mxu0 0.0
    %122 = vmatprep.subr.mxu0 0.0
    %123 = vmatpush1.msra.mxu0 0.0
    %124 = vmatprep.subr.mxu0 0.0
    %125 = vmatpush1.msra.mxu0 0.0
    %126 = vmatprep.subr.mxu0 0.0
    %127 = vmatpush1.msra.mxu0 0.0
    %128 = vmatprep.subr.mxu0 0.0
    %129 = vmatpush1.msra.mxu0 0.0
    %130 = vmatprep.subr.mxu0 0.0
    %131 = vmatpush1.msra.mxu0 0.0
    %132 = vmatprep.subr.mxu0 0.0
    %133 = vmatpush1.msra.mxu0 0.0
    %134 = vmatprep.mubr.f32.mxu0 0.0
    %135 = vmatmul.mubr.f32.gmra.mrb[0].mxu0 %v55
    %v136 = vpop.f32.mrb[0].mxu0
    %v137 = vadd.f32 0.0, %v136
    %v138 = vpop.f32.mrb[0].mxu0
    %139 = vmatprep.mubr.f32.mxu0 0.0
    %140 = vmatmul.mubr.f32.gmra.mrb[0].mxu0 %v58
    %v141 = vpop.f32.mrb[0].mxu0
    %v142 = vadd.f32 0.0, %v141
    %v143 = vpop.f32.mrb[0].mxu0
    %144 = vmatprep.mubr.f32.mxu0 0.0
    %145 = vmatmul.mubr.f32.gmra.mrb[0].mxu0 %v61
    %v146 = vpop.f32.mrb[0].mxu0
    %v147 = vadd.f32 0.0, %v146
    %v148 = vpop.f32.mrb[0].mxu0
    %149 = vmatprep.mubr.f32.mxu0 0.0
    %150 = vmatmul.mubr.f32.gmra.mrb[0].mxu0 %v64
    %v151 = vpop.f32.mrb[0].mxu0
    %v152 = vadd.f32 0.0, %v151
    %v153 = vpop.f32.mrb[0].mxu0
    %154 = vdwg.mxu0
    %155 = vst [vmem:[#allocation7] sm:$0xff] %v137
    %156 = vst [vmem:[#allocation7 + $0x8] sm:$0xff] %v142
    %157 = vst [vmem:[#allocation7 + $0x10] sm:$0xff] %v147
    %158 = vst [vmem:[#allocation7 + $0x18] sm:$0xff] %v152
    // Predicated region
    $region18: #{tpu_custom_call.1} parent=1 // pred_check
      _
    $region19: #{tpu_custom_call.1} parent=1 // pred_check_branch
      %160 = sbr.rel (0) target = $region21
    $region20: #{tpu_custom_call.1} parent=1 // pred_region
      %s162 = ssub.s32 512, 512
      %163 = vsyncadd [#allocation4], %s162
      %s164 = sshll.u32 [#allocation7], 4
      %s165 = int_to_ptr.vmem [resolvable:$true] %s164
      %170 = dma.vmem_to_hbm [thread:$0]  %s165, 512, %s2, [#allocation4], 128, 128, 8
    $region21: #{tpu_custom_call.1} parent=1 // pred_fallthru
      _
    // Predicated region
    $region22: #{tpu_custom_call.1} parent=1 // pred_check
      _
    $region23: #{tpu_custom_call.1} parent=1 // pred_check_branch
      %172 = sbr.rel (0) target = $region25
    $region24: #{tpu_custom_call.1} parent=1 // pred_region
      %173 = dma.done [#allocation4], 512
    $region25: #{tpu_custom_call.1} parent=1 // pred_fallthru
      _
    %174 = vsyncpa [#allocation3], 1
    %175 = vsyncpa [#allocation6], 1
    %176 = vsyncpa [#allocation4], 1

</llo_original>
